<compile_context>
chip_gen: v7x
topology: tpu7x:2x2x1
jax: 0.10.0
libtpu: 0.0.40
codegen_flags: <defaults>
</compile_context>

<pallas_src>
import functools

import jax
import jax.numpy as jnp
from jax import lax
from jax.experimental import pallas as pl
from jax.experimental.pallas import tpu as pltpu

LANES = 128
SUBLANES = 8
CHUNK_ROWS = 512       # in-kernel sub-chunk (512,128) f32 -> bounded live temporaries
MAX_TILE_ROWS = 4096   # (4096,128) f32 x+t = 4 MiB/step, 8 MiB double-buffered


def _round_up(v, m):
    return -(-v // m) * m


def _focal_kernel(x_ref, t_ref, out_ref, *, alpha, gamma, n_valid,
                  tile_rows, chunk_rows, needs_mask):
    nchunks = tile_rows // chunk_rows
    sub = chunk_rows // SUBLANES
    i = pl.program_id(0)

    def chunk_loss(c):
        r0 = pl.multiple_of(c * chunk_rows, chunk_rows)
        x = x_ref[pl.ds(r0, chunk_rows), :].astype(jnp.float32)
        t = t_ref[pl.ds(r0, chunk_rows), :].astype(jnp.float32)

        e = jnp.exp(-jnp.abs(x))                                   # EUP op 1
        bce = jnp.maximum(x, 0.0) - x * t + jnp.log1p(e)           # EUP op 2
        # Binary-target closed form of 1 - exp(-bce): avoids a third exp and
        # is numerically nicer (no 1 - (1 - tiny) cancellation, no clamp).
        t_is_one = t == 1.0
        agrees = (x >= 0.0) == t_is_one
        one_minus_pt = jnp.where(agrees, e, 1.0) / (1.0 + e)
        at = jnp.where(t_is_one, jnp.float32(1.0 - alpha), jnp.float32(alpha))

        g = float(gamma)
        if g.is_integer() and 0.0 <= g <= 8.0:
            gi = int(g)
            if gi == 0:
                mod = jnp.ones_like(one_minus_pt)
            else:
                mod = one_minus_pt
                for _ in range(gi - 1):
                    mod = mod * one_minus_pt
        else:
            mod = one_minus_pt ** g

        return at * mod * bce, r0

    def body(c, acc):
        f, _ = chunk_loss(c)
        return acc + f.reshape(sub, SUBLANES, LANES).sum(axis=0)

    def body_masked(c, acc):
        f, r0 = chunk_loss(c)
        row = (i * tile_rows + r0
               + lax.broadcasted_iota(jnp.int32, (chunk_rows, LANES), 0))
        lane = lax.broadcasted_iota(jnp.int32, (chunk_rows, LANES), 1)
        valid = row * LANES + lane < n_valid
        f = jnp.where(valid, f, 0.0)
        return acc + f.reshape(sub, SUBLANES, LANES).sum(axis=0)

    zero = jnp.zeros((SUBLANES, LANES), jnp.float32)
    if needs_mask:
        is_last = i == pl.num_programs(0) - 1

        @pl.when(jnp.logical_not(is_last))
        def _():
            out_ref[...] = lax.fori_loop(0, nchunks, body, zero)

        @pl.when(is_last)
        def _():
            out_ref[...] = lax.fori_loop(0, nchunks, body_masked, zero)
    else:
        out_ref[...] = lax.fori_loop(0, nchunks, body, zero)


def weighted_focal_loss(inputs, targets, alpha=0.25, gamma=2):
    """Pallas TPU implementation of WeightedFocalLoss.forward (mean reduction)."""
    assert inputs.shape == targets.shape
    x = jnp.ravel(inputs)          # free reshape; dtype left as-is (cast in-kernel)
    t = jnp.ravel(targets)
    n = x.shape[0]

    # Only pad to the next lane multiple (<=127 elems) when needed so the
    # reshape to (rows, 128) stays a free bitcast.  Pad values are irrelevant:
    # the kernel masks every element with global index >= n.
    n_pad = (-n) % LANES
    if n_pad:
        x = jnp.pad(x, (0, n_pad))
        t = jnp.pad(t, (0, n_pad))
    rows = (n + n_pad) // LANES

    chunk_rows = min(CHUNK_ROWS, _round_up(rows, SUBLANES))
    tile_rows = min(MAX_TILE_ROWS, _round_up(rows, chunk_rows))
    num_blocks = pl.cdiv(rows, tile_rows)
    needs_mask = (num_blocks * tile_rows * LANES) != n

    x2 = x.reshape(rows, LANES)
    t2 = t.reshape(rows, LANES)

    kernel = functools.partial(
        _focal_kernel, alpha=float(alpha), gamma=gamma, n_valid=n,
        tile_rows=tile_rows, chunk_rows=chunk_rows, needs_mask=needs_mask)

    in_spec = pl.BlockSpec((tile_rows, LANES), lambda i: (i, 0))
    out_spec = pl.BlockSpec((SUBLANES, LANES), lambda i: (i, 0))

    elems = num_blocks * tile_rows * LANES
    cost = pl.CostEstimate(
        flops=14 * elems,
        transcendentals=2 * elems,
        bytes_accessed=rows * LANES * (x2.dtype.itemsize + t2.dtype.itemsize)
        + num_blocks * SUBLANES * LANES * 4,
    )

    partials = pl.pallas_call(
        kernel,
        out_shape=jax.ShapeDtypeStruct((num_blocks * SUBLANES, LANES), jnp.float32),
        grid=(num_blocks,),
        in_specs=[in_spec, in_spec],
        out_specs=out_spec,
        compiler_params=pltpu.CompilerParams(
            dimension_semantics=("parallel",),
            vmem_limit_bytes=32 * 1024 * 1024,
        ),
        cost_estimate=cost,
    )(x2, t2)

    return jnp.sum(partials) / jnp.float32(n)


def _reference_focal_loss(inputs, targets, alpha=0.25, gamma=2):
    x = inputs.astype(jnp.float32)
    t = targets.astype(jnp.float32)
    bce = jnp.maximum(x, 0.0) - x * t + jnp.log1p(jnp.exp(-jnp.abs(x)))
    at = jnp.where(t.astype(jnp.int32) == 1, 1.0 - alpha, alpha)
    pt = jnp.exp(-bce)
    return jnp.mean(at * (1.0 - pt) ** gamma * bce)


if __name__ == "__main__":
    key = jax.random.PRNGKey(0)
    ALPHA, GAMMA = 0.25, 2   # module __init__ defaults

    # 1-D logits + binary targets (the module's gather/broadcast requires 1-D).
    # Sizes chosen to exercise: ragged tail + single tiny block (1000),
    # no-mask exact fit (2048), and multi-block + multi-chunk + masked last
    # block (600000).
    for n in (1000, 2048, 600_000):
        k1, k2 = jax.random.split(jax.random.fold_in(key, n))
        logits = jax.random.normal(k1, (n,), dtype=jnp.float32) * 2.0
        targets = jax.random.bernoulli(k2, p=0.3, shape=(n,)).astype(jnp.float32)

        loss = jax.block_until_ready(
            weighted_focal_loss(logits, targets, alpha=ALPHA, gamma=GAMMA))
        ref = jax.block_until_ready(
            _reference_focal_loss(logits, targets, alpha=ALPHA, gamma=GAMMA))
        assert jnp.allclose(loss, ref, rtol=1e-4, atol=1e-6), (n, loss, ref)

    print("KERNEL_OK")
</pallas_src>

<mosaic_0001>
module attributes {stable_mosaic.version = 11 : i64} {
  func.func @_focal_kernel(%arg0: i32, %arg1: memref<8x128xf32, #tpu.memory_space<vmem>>, %arg2: memref<8x128xf32, #tpu.memory_space<vmem>>, %arg3: memref<8x128xf32, #tpu.memory_space<vmem>>) attributes {dimension_semantics = [#tpu.dimension_semantics<parallel>], iteration_bounds = array<i64: 1>, scalar_prefetch = 0 : i64, scratch_operands = 0 : i64, tpu.core_type = #tpu.core_type<tc>, window_params = [{transform_indices = @transform_0, window_bounds = array<i64: 8, 128>}, {transform_indices = @transform_1, window_bounds = array<i64: 8, 128>}, {transform_indices = @transform_2, window_bounds = array<i64: 8, 128>}]} {
    %cst = arith.constant 0.000000e+00 : f32
    %0 = vector.broadcast %cst : f32 to vector<8x128xf32>
    %c0_i32 = arith.constant 0 : i32
    %1 = arith.cmpi eq, %arg0, %c0_i32 : i32
    %true = arith.constant true
    %2 = arith.xori %1, %true : i1
    %3 = arith.extui %2 : i1 to i32
    %c0_i32_0 = arith.constant 0 : i32
    %4 = arith.cmpi ne, %3, %c0_i32_0 : i32
    scf.if %4 {
      %c0_i32_2 = arith.constant 0 : i32
      %c8_i32 = arith.constant 8 : i32
      %7 = arith.muli %c0_i32_2, %c8_i32 : i32
      %8 = tpu.assume_multiple %7, 8 : i32
      %9 = arith.index_cast %8 : i32 to index
      %c0 = arith.constant 0 : index
      %10 = vector.load %arg1[%9, %c0] : memref<8x128xf32, #tpu.memory_space<vmem>>, vector<8x128xf32>
      %11 = arith.index_cast %8 : i32 to index
      %c0_3 = arith.constant 0 : index
      %12 = vector.load %arg2[%11, %c0_3] : memref<8x128xf32, #tpu.memory_space<vmem>>, vector<8x128xf32>
      %13 = math.absf %10 : vector<8x128xf32>
      %cst_4 = arith.constant 0.000000e+00 : f32
      %14 = vector.broadcast %cst_4 : f32 to vector<8x128xf32>
      %15 = arith.subf %14, %13 : vector<8x128xf32>
      %16 = math.exp %15 : vector<8x128xf32>
      %cst_5 = arith.constant 0.000000e+00 : f32
      %17 = vector.broadcast %cst_5 : f32 to vector<8x128xf32>
      %18 = arith.maximumf %10, %17 : vector<8x128xf32>
      %19 = arith.mulf %10, %12 : vector<8x128xf32>
      %20 = arith.subf %18, %19 : vector<8x128xf32>
      %21 = math.log1p %16 : vector<8x128xf32>
      %22 = arith.addf %20, %21 : vector<8x128xf32>
      %cst_6 = arith.constant 1.000000e+00 : f32
      %23 = vector.broadcast %cst_6 : f32 to vector<8x128xf32>
      %24 = arith.cmpf oeq, %12, %23 : vector<8x128xf32>
      %cst_7 = arith.constant 0.000000e+00 : f32
      %25 = vector.broadcast %cst_7 : f32 to vector<8x128xf32>
      %26 = arith.cmpf oge, %10, %25 : vector<8x128xf32>
      %27 = arith.xori %26, %24 : vector<8x128xi1>
      %cst_8 = arith.constant dense<true> : vector<8x128xi1>
      %28 = arith.xori %27, %cst_8 : vector<8x128xi1>
      %cst_9 = arith.constant 1.000000e+00 : f32
      %29 = vector.broadcast %cst_9 : f32 to vector<8x128xf32>
      %30 = arith.select %28, %16, %29 : vector<8x128xi1>, vector<8x128xf32>
      %cst_10 = arith.constant 1.000000e+00 : f32
      %31 = vector.broadcast %cst_10 : f32 to vector<8x128xf32>
      %32 = arith.addf %31, %16 : vector<8x128xf32>
      %33 = arith.divf %30, %32 : vector<8x128xf32>
      %cst_11 = arith.constant 7.500000e-01 : f32
      %cst_12 = arith.constant 2.500000e-01 : f32
      %34 = vector.broadcast %cst_11 : f32 to vector<8x128xf32>
      %35 = vector.broadcast %cst_12 : f32 to vector<8x128xf32>
      %36 = arith.select %24, %34, %35 : vector<8x128xi1>, vector<8x128xf32>
      %37 = arith.mulf %33, %33 : vector<8x128xf32>
      %38 = arith.mulf %36, %37 : vector<8x128xf32>
      %39 = arith.mulf %38, %22 : vector<8x128xf32>
      %40 = vector.shape_cast %39 : vector<8x128xf32> to vector<1x8x128xf32>
      %cst_13 = arith.constant dense<0.000000e+00> : vector<8x128xf32>
      %41 = vector.multi_reduction <add>, %40, %cst_13 [0] : vector<1x8x128xf32> to vector<8x128xf32>
      %42 = arith.addf %0, %41 : vector<8x128xf32>
      %c1_i32 = arith.constant 1 : i32
      %c0_14 = arith.constant 0 : index
      %c0_15 = arith.constant 0 : index
      %43 = vector.load %arg3[%c0_14, %c0_15] : memref<8x128xf32, #tpu.memory_space<vmem>>, vector<8x128xf32>
      tpu.vector_store %arg3[%c0_14, %c0_15], %42 {strides = array<i32>} : memref<8x128xf32, #tpu.memory_space<vmem>>, vector<8x128xf32>,
    } else {
    }
    %5 = arith.extui %1 : i1 to i32
    %c0_i32_1 = arith.constant 0 : i32
    %6 = arith.cmpi ne, %5, %c0_i32_1 : i32
    scf.if %6 {
      %c0_i32_2 = arith.constant 0 : i32
      %c8_i32 = arith.constant 8 : i32
      %7 = arith.muli %c0_i32_2, %c8_i32 : i32
      %8 = tpu.assume_multiple %7, 8 : i32
      %9 = arith.index_cast %8 : i32 to index
      %c0 = arith.constant 0 : index
      %10 = vector.load %arg1[%9, %c0] : memref<8x128xf32, #tpu.memory_space<vmem>>, vector<8x128xf32>
      %11 = arith.index_cast %8 : i32 to index
      %c0_3 = arith.constant 0 : index
      %12 = vector.load %arg2[%11, %c0_3] : memref<8x128xf32, #tpu.memory_space<vmem>>, vector<8x128xf32>
      %13 = math.absf %10 : vector<8x128xf32>
      %cst_4 = arith.constant 0.000000e+00 : f32
      %14 = vector.broadcast %cst_4 : f32 to vector<8x128xf32>
      %15 = arith.subf %14, %13 : vector<8x128xf32>
      %16 = math.exp %15 : vector<8x128xf32>
      %cst_5 = arith.constant 0.000000e+00 : f32
      %17 = vector.broadcast %cst_5 : f32 to vector<8x128xf32>
      %18 = arith.maximumf %10, %17 : vector<8x128xf32>
      %19 = arith.mulf %10, %12 : vector<8x128xf32>
      %20 = arith.subf %18, %19 : vector<8x128xf32>
      %21 = math.log1p %16 : vector<8x128xf32>
      %22 = arith.addf %20, %21 : vector<8x128xf32>
      %cst_6 = arith.constant 1.000000e+00 : f32
      %23 = vector.broadcast %cst_6 : f32 to vector<8x128xf32>
      %24 = arith.cmpf oeq, %12, %23 : vector<8x128xf32>
      %cst_7 = arith.constant 0.000000e+00 : f32
      %25 = vector.broadcast %cst_7 : f32 to vector<8x128xf32>
      %26 = arith.cmpf oge, %10, %25 : vector<8x128xf32>
      %27 = arith.xori %26, %24 : vector<8x128xi1>
      %cst_8 = arith.constant dense<true> : vector<8x128xi1>
      %28 = arith.xori %27, %cst_8 : vector<8x128xi1>
      %cst_9 = arith.constant 1.000000e+00 : f32
      %29 = vector.broadcast %cst_9 : f32 to vector<8x128xf32>
      %30 = arith.select %28, %16, %29 : vector<8x128xi1>, vector<8x128xf32>
      %cst_10 = arith.constant 1.000000e+00 : f32
      %31 = vector.broadcast %cst_10 : f32 to vector<8x128xf32>
      %32 = arith.addf %31, %16 : vector<8x128xf32>
      %33 = arith.divf %30, %32 : vector<8x128xf32>
      %cst_11 = arith.constant 7.500000e-01 : f32
      %cst_12 = arith.constant 2.500000e-01 : f32
      %34 = vector.broadcast %cst_11 : f32 to vector<8x128xf32>
      %35 = vector.broadcast %cst_12 : f32 to vector<8x128xf32>
      %36 = arith.select %24, %34, %35 : vector<8x128xi1>, vector<8x128xf32>
      %37 = arith.mulf %33, %33 : vector<8x128xf32>
      %38 = arith.mulf %36, %37 : vector<8x128xf32>
      %39 = arith.mulf %38, %22 : vector<8x128xf32>
      %c8_i32_13 = arith.constant 8 : i32
      %40 = arith.muli %arg0, %c8_i32_13 : i32
      %41 = arith.addi %40, %8 : i32
      %42 = tpu.iota {dimensions = array<i32: 0>} : vector<8x128xi32>
      %43 = vector.broadcast %41 : i32 to vector<8x128xi32>
      %44 = arith.addi %43, %42 : vector<8x128xi32>
      %45 = tpu.iota {dimensions = array<i32: 1>} : vector<8x128xi32>
      %c128_i32 = arith.constant 128 : i32
      %46 = vector.broadcast %c128_i32 : i32 to vector<8x128xi32>
      %47 = arith.muli %44, %46 : vector<8x128xi32>
      %48 = arith.addi %47, %45 : vector<8x128xi32>
      %c1000_i32 = arith.constant 1000 : i32
      %49 = vector.broadcast %c1000_i32 : i32 to vector<8x128xi32>
      %50 = arith.cmpi slt, %48, %49 : vector<8x128xi32>
      %cst_14 = arith.constant 0.000000e+00 : f32
      %51 = vector.broadcast %cst_14 : f32 to vector<8x128xf32>
      %52 = arith.select %50, %39, %51 : vector<8x128xi1>, vector<8x128xf32>
      %53 = vector.shape_cast %52 : vector<8x128xf32> to vector<1x8x128xf32>
      %cst_15 = arith.constant dense<0.000000e+00> : vector<8x128xf32>
      %54 = vector.multi_reduction <add>, %53, %cst_15 [0] : vector<1x8x128xf32> to vector<8x128xf32>
      %55 = arith.addf %0, %54 : vector<8x128xf32>
      %c1_i32 = arith.constant 1 : i32
      %c0_16 = arith.constant 0 : index
      %c0_17 = arith.constant 0 : index
      %56 = vector.load %arg3[%c0_16, %c0_17] : memref<8x128xf32, #tpu.memory_space<vmem>>, vector<8x128xf32>
      tpu.vector_store %arg3[%c0_16, %c0_17], %55 {strides = array<i32>} : memref<8x128xf32, #tpu.memory_space<vmem>>, vector<8x128xf32>,
    } else {
    }
    return
  }
  func.func @transform_0(%arg0: i32) -> (i32, i32) {
    %c0_i32 = arith.constant 0 : i32
    %c0_i32_0 = arith.constant 0 : i32
    return %arg0, %c0_i32 : i32, i32
  }
  func.func @transform_1(%arg0: i32) -> (i32, i32) {
    %c0_i32 = arith.constant 0 : i32
    %c0_i32_0 = arith.constant 0 : i32
    return %arg0, %c0_i32 : i32, i32
  }
  func.func @transform_2(%arg0: i32) -> (i32, i32) {
    %c0_i32 = arith.constant 0 : i32
    %c0_i32_0 = arith.constant 0 : i32
    return %arg0, %c0_i32 : i32, i32
  }
}

</mosaic_0001>

<llo_original>
// kernel: tpu_custom_call.1
$region0: #{tpu_custom_call.1}
  #allocation0 [shape = 'u32[]', space=smem, size = 0x4, offset = 0x4, fixed_abs, tag = 'smem constant byte address 0x4 - core index']
  #allocation1 [shape = 'u32[144,128]{1,0:T(1,128)}', space=vmem, size = 0x12000, scoped, tag = 'internal scratch']
  %s0 = inlined_call_operand.hbm [shape: f32[8,128], index: 0, kind: input, shape index: {}]
  %s1 = inlined_call_operand.hbm [shape: f32[8,128], index: 1, kind: input, shape index: {}]
  %s2 = inlined_call_operand.hbm [shape: f32[8,128], index: 2, kind: output, shape index: {}]
  %s3 = sld [smem:[#allocation0]]
  $region34: #{tpu_custom_call.1} parent=0
    _
  %s5 = ssub.s32 1, %s3
  %s6 = scalar_select 0, %s5, %s3
  $region1: #{tpu_custom_call.1} parent=0
    #allocation2 [shape = 'u8[4096]{0}', space=vmem, size = 0x1000, scoped, tag = 'input window, operand 0, single buffered']
    #allocation3 [shape = 's32[1]{0}', space=sflag, size = 0x4, scoped, tag = 'scoped memory for tpu_custom_call.1']
    #allocation4 [shape = 's32[1]{0}', space=sflag, size = 0x4, scoped, tag = 'scoped memory for tpu_custom_call.1']
    #allocation5 [shape = 'u8[4096]{0}', space=vmem, size = 0x1000, scoped, tag = 'input window, operand 1, single buffered']
    #allocation6 [shape = 's32[1]{0}', space=sflag, size = 0x4, scoped, tag = 'scoped memory for tpu_custom_call.1']
    #allocation7 [shape = 'u8[4096]{0}', space=vmem, size = 0x1000, scoped, tag = 'output window, operand 0, single buffered']
    %7 = vsyncpa [#allocation3], 0
    %8 = vsyncpa [#allocation6], 0
    %9 = vsyncpa [#allocation4], 0
    // Predicated region
    $region2: #{tpu_custom_call.1} parent=1 // pred_check
      _
    $region3: #{tpu_custom_call.1} parent=1 // pred_check_branch
      %11 = sbr.rel (0) target = $region5
    $region4: #{tpu_custom_call.1} parent=1 // pred_region
      %s13 = ssub.s32 128, 128
      %14 = vsyncadd [#allocation3], %s13
      %s16 = sshll.u32 [#allocation2], 4
      %s17 = int_to_ptr.vmem [resolvable:$true] %s16
      %19 = dma.hbm_to_vmem [thread:$0]  %s0, 128, %s17, [#allocation3]
    $region5: #{tpu_custom_call.1} parent=1 // pred_fallthru
      _
    // Predicated region
    $region6: #{tpu_custom_call.1} parent=1 // pred_check
      _
    $region7: #{tpu_custom_call.1} parent=1 // pred_check_branch
      %21 = sbr.rel (0) target = $region9
    $region8: #{tpu_custom_call.1} parent=1 // pred_region
      %s23 = ssub.s32 128, 128
      %24 = vsyncadd [#allocation6], %s23
      %s26 = sshll.u32 [#allocation5], 4
      %s27 = int_to_ptr.vmem [resolvable:$true] %s26
      %29 = dma.hbm_to_vmem [thread:$0]  %s1, 128, %s27, [#allocation6]
    $region9: #{tpu_custom_call.1} parent=1 // pred_fallthru
      _
    // Predicated region
    $region10: #{tpu_custom_call.1} parent=1 // pred_check
      _
    $region11: #{tpu_custom_call.1} parent=1 // pred_check_branch
      %31 = sbr.rel (0) target = $region13
    $region12: #{tpu_custom_call.1} parent=1 // pred_region
      %32 = dma.done [#allocation3], 128
    $region13: #{tpu_custom_call.1} parent=1 // pred_fallthru
      _
    // Predicated region
    $region14: #{tpu_custom_call.1} parent=1 // pred_check
      _
    $region15: #{tpu_custom_call.1} parent=1 // pred_check_branch
      %34 = sbr.rel (0) target = $region17
    $region16: #{tpu_custom_call.1} parent=1 // pred_region
      %35 = dma.done [#allocation6], 128
    $region17: #{tpu_custom_call.1} parent=1 // pred_fallthru
      _
    %p36 = scmp.eq.s32.totalorder 0, 0
    %p37 = scmp.ne.s32.totalorder 0, 0
    // Predicated region
    $region18: #{tpu_custom_call.1} parent=1 // pred_check
      %p38 = pneg %p37
    $region19: #{tpu_custom_call.1} parent=1 // pred_check_branch
      %40 = sbr.rel (%p38) target = $region21
    $region20: #{tpu_custom_call.1} parent=1 // pred_region
      %v41 = vld [vmem:[#allocation2] sm:$0xff]
      %v42 = vld [vmem:[#allocation5] sm:$0xff]
      %v43 = vand.u32 2147483647, %v41
      %v44 = vsub.f32 0.0, %v43
      %v45 = vmul.f32 %v44, 1.442695
      %v46 = vpow.pop %v45
      %v47 = vmax.f32 %v41, 0.0
      %v48 = vmul.f32 %v41, %v42
      %v49 = vsub.f32 %v47, %v48
      %v50 = vadd.f32 %v46, 1.0
      %v51 = vlog2.pop %v50
      %v52 = vmul.f32 %v51, 0.6931472
      %v53 = vmul.f32 -0.5, %v46
      %v54 = vadd.f32 %v53, 1.0
      %v55 = vmul.f32 %v54, %v46
      %v56 = vand.u32 2147483647, %v46
      %vm57 = vcmp.lt.f32.partialorder %v56, 0.0004427343
      %v58 = vsel %vm57, %v55, %v52
      %v59 = vadd.f32 %v49, %v58
      %vm60 = vcmp.eq.f32.partialorder %v42, 1.0
      %vm61 = vcmp.ge.f32.partialorder %v41, 0.0
      %vm62 = vmxor %vm61, %vm60
      %vm63 = vmxor %vm62, 1
      %v64 = vsel %vm63, %v46, 1.0
      %v65 = vadd.f32 %v46, 1.0
      %v66 = vrcp.pop %v65
      %v67 = vmul.f32 %v64, %v66
      %v68 = vsel %vm60, 0.75, 0.25
      %v69 = vmul.f32 %v67, %v67
      %v70 = vmul.f32 %v68, %v69
      %v71 = vmul.f32 %v70, %v59
      %v72 = vadd.f32 %v71, 0.0
      %v73 = vadd.f32 %v72, 0.0
      %74 = vst [vmem:[#allocation7] sm:$0xff] %v73
    $region21: #{tpu_custom_call.1} parent=1 // pred_fallthru
      _
    // Predicated region
    $region22: #{tpu_custom_call.1} parent=1 // pred_check
      %p75 = pneg %p36
    $region23: #{tpu_custom_call.1} parent=1 // pred_check_branch
      %77 = sbr.rel (%p75) target = $region25
    $region24: #{tpu_custom_call.1} parent=1 // pred_region
      %v78 = vld [vmem:[#allocation2] sm:$0xff]
      %v79 = vld [vmem:[#allocation5] sm:$0xff]
      %v80 = vand.u32 2147483647, %v78
      %v81 = vsub.f32 0.0, %v80
      %v82 = vmul.f32 %v81, 1.442695
      %v83 = vpow.pop %v82
      %v84 = vmax.f32 %v78, 0.0
      %v85 = vmul.f32 %v78, %v79
      %v86 = vsub.f32 %v84, %v85
      %v87 = vadd.f32 %v83, 1.0
      %v88 = vlog2.pop %v87
      %v89 = vmul.f32 %v88, 0.6931472
      %v90 = vmul.f32 -0.5, %v83
      %v91 = vadd.f32 %v90, 1.0
      %v92 = vmul.f32 %v91, %v83
      %v93 = vand.u32 2147483647, %v83
      %vm94 = vcmp.lt.f32.partialorder %v93, 0.0004427343
      %v95 = vsel %vm94, %v92, %v89
      %v96 = vadd.f32 %v86, %v95
      %vm97 = vcmp.eq.f32.partialorder %v79, 1.0
      %vm98 = vcmp.ge.f32.partialorder %v78, 0.0
      %vm99 = vmxor %vm98, %vm97
      %vm100 = vmxor %vm99, 1
      %v101 = vsel %vm100, %v83, 1.0
      %v102 = vadd.f32 %v83, 1.0
      %v103 = vrcp.pop %v102
      %v104 = vmul.f32 %v101, %v103
      %v105 = vsel %vm97, 0.75, 0.25
      %v106 = vmul.f32 %v104, %v104
      %v107 = vmul.f32 %v105, %v106
      %v108 = vmul.f32 %v107, %v96
      %s109 = smul.u32 0, 8
      %s110 = sadd.s32 %s109, 0
      %v111 = vlaneseq
      %v112 = vshrl.u32 %v111, 7
      %v113 = vstv %s110
      %v114 = vadd.s32 %v113, %v112
      %v115 = vlaneseq
      %v116 = vand.u32 %v115, 127
      %v117 = vmul.u32 %v114, 128
      %v118 = vadd.s32 %v117, %v116
      %vm119 = vcmp.lt.s32.totalorder %v118, 1000
      %v120 = vsel %vm119, %v108, 0.0
      %v121 = vadd.f32 %v120, 0.0
      %v122 = vadd.f32 %v121, 0.0
      %123 = vst [vmem:[#allocation7] sm:$0xff] %v122
    $region25: #{tpu_custom_call.1} parent=1 // pred_fallthru
      _
    // Predicated region
    $region26: #{tpu_custom_call.1} parent=1 // pred_check
      _
    $region27: #{tpu_custom_call.1} parent=1 // pred_check_branch
      %125 = sbr.rel (0) target = $region29
    $region28: #{tpu_custom_call.1} parent=1 // pred_region
      %s127 = ssub.s32 128, 128
      %128 = vsyncadd [#allocation4], %s127
      %s130 = sshll.u32 [#allocation7], 4
      %s131 = int_to_ptr.vmem [resolvable:$true] %s130
      %133 = dma.vmem_to_hbm [thread:$0]  %s131, 128, %s2, [#allocation4]
    $region29: #{tpu_custom_call.1} parent=1 // pred_fallthru
      _
    // Predicated region
    $region30: #{tpu_custom_call.1} parent=1 // pred_check
      _
    $region31: #{tpu_custom_call.1} parent=1 // pred_check_branch
      %135 = sbr.rel (0) target = $region33
    $region32: #{tpu_custom_call.1} parent=1 // pred_region
      %136 = dma.done [#allocation4], 128
    $region33: #{tpu_custom_call.1} parent=1 // pred_fallthru
      _
    %137 = vsyncpa [#allocation3], 1
    %138 = vsyncpa [#allocation6], 1
    %139 = vsyncpa [#allocation4], 1

</llo_original>
